<compile_context>
chip_gen: v5e
topology: v5e:2x2
jax: 0.10.0
libtpu: 0.0.40
codegen_flags: <defaults>
</compile_context>

<pallas_src>
import functools

import jax
import jax.numpy as jnp
from jax.experimental import pallas as pl
from jax.experimental.pallas import tpu as pltpu


OUT_PAD = 128        # lane-dense output width: q1 in lane 0, q2 in lane 1.
_MISH_CLAMP = 12.0   # tanh(softplus(12)) == 1.0 to ~1e-11; safe in bf16 too.


def _round_up(x, m):
    return ((x + m - 1) // m) * m


def _elementwise_dtype():
    """bf16 elementwise (bias-add + Mish) on chips with bf16 VPU/EUP."""
    try:
        kind = jax.devices()[0].device_kind.lower()
    except Exception:
        return jnp.float32
    if ("v6" in kind) or ("v7" in kind) or ("7x" in kind):
        return jnp.bfloat16
    return jnp.float32   # v5e and older: no bf16 VPU/EUP -> stay f32.


def _mish_fast(x):
    # mish(x) = x * tanh(softplus(x));
    # tanh(softplus(x)) = ((1+e^x)^2 - 1) / ((1+e^x)^2 + 1).
    # exp is clamped at 12 (ratio is already 1.0 there); the ratio itself is
    # computed in f32 (t^2 is not representable accurately in bf16), the rest
    # runs in x.dtype (bf16 on v6e/v7x, f32 on v5e).
    t = 1.0 + jnp.exp(jnp.minimum(x, _MISH_CLAMP))
    t2 = (t * t).astype(jnp.float32)
    tanh_sp = ((t2 - 1.0) * pl.reciprocal(t2 + 1.0, approx=True)).astype(x.dtype)
    return jnp.where(x > _MISH_CLAMP, x, x * tanh_sp)


def _critic_kernel(s_ref, a_ref, g_ref, w1s_ref, w1a_ref, w1g_ref,
                   w23_ref, w4_ref, b123_ref, b4_ref, out_ref,
                   *, hp, ew_dtype):
    f32 = jnp.float32
    mxu = jnp.bfloat16

    # bf16 MXU operands; f32 accumulation; elementwise chain in ew_dtype.
    s = s_ref[...].astype(mxu)
    a = a_ref[...].astype(mxu)
    g = g_ref[...].astype(mxu)
    b123 = b123_ref[...].astype(ew_dtype)

    # Layer 1: x @ W1  ==  s @ W1_s + a @ W1_a + g @ W1_g  (no concat needed;
    # separate weight arrays keep every slice sublane-pack aligned).
    h = (jnp.dot(s, w1s_ref[...], preferred_element_type=f32)
         + jnp.dot(a, w1a_ref[...], preferred_element_type=f32)
         + jnp.dot(g, w1g_ref[...], preferred_element_type=f32))
    h = _mish_fast(h.astype(ew_dtype) + b123[0:1, :])

    if hp is None:
        # Fused block-diagonal layers 2/3 (only used when 2*hidden <= 128).
        for layer in range(2):
            acc = jnp.dot(h.astype(mxu), w23_ref[layer],
                          preferred_element_type=f32)
            h = _mish_fast(acc.astype(ew_dtype) + b123[layer + 1:layer + 2, :])
        q = jnp.dot(h.astype(mxu), w4_ref[...], preferred_element_type=f32)
    else:
        # Per-critic layers 2/3: two (blk,hp)@(hp,hp) matmuls per layer
        # (halves MXU work vs. the zero-padded block-diagonal form).
        ha = h[:, :hp]      # critic 1 half (lane-aligned: hp % 128 == 0)
        hb = h[:, hp:]      # critic 2 half
        for layer in range(2):
            acc_a = jnp.dot(ha.astype(mxu), w23_ref[2 * layer],
                            preferred_element_type=f32)
            acc_b = jnp.dot(hb.astype(mxu), w23_ref[2 * layer + 1],
                            preferred_element_type=f32)
            ha = _mish_fast(acc_a.astype(ew_dtype)
                            + b123[layer + 1:layer + 2, :hp])
            hb = _mish_fast(acc_b.astype(ew_dtype)
                            + b123[layer + 1:layer + 2, hp:])
        # Layer 4: q1 -> lane 0 (from critic-1 rows), q2 -> lane 1.
        q = (jnp.dot(ha.astype(mxu), w4_ref[0:hp, :],
                     preferred_element_type=f32)
             + jnp.dot(hb.astype(mxu), w4_ref[hp:, :],
                       preferred_element_type=f32))

    out_ref[...] = (q + b4_ref[...]).astype(out_ref.dtype)


def pack_params(qf1_params, qf2_params, state_dim, action_dim, goal_dim):
    """One-time parameter glue: fuse both critics' weights.

    Each net is [w1, b1, w2, b2, w3, b3, w4, b4] with weights stored (in, out)
    (PyTorch stores (out, in); transpose once when importing)."""
    p1 = [jnp.asarray(p, jnp.float32) for p in qf1_params]
    p2 = [jnp.asarray(p, jnp.float32) for p in qf2_params]
    w1_1, b1_1, w2_1, b2_1, w3_1, b3_1, w4_1, b4_1 = p1
    w1_2, b1_2, w2_2, b2_2, w3_2, b3_2, w4_2, b4_2 = p2
    d_in, hidden = w1_1.shape
    assert d_in == state_dim + action_dim + goal_dim

    split = (2 * hidden) > 128
    if split:
        hp = _round_up(hidden, 128)   # per-critic lane-aligned hidden width
        h2 = 2 * hp
        off2 = hp
    else:
        hp = None
        h2 = _round_up(2 * hidden, 128)
        off2 = hidden

    def pack_cols(wa, wb):
        rows = wa.shape[0]
        out = jnp.zeros((rows, h2), jnp.float32)
        return out.at[:, :hidden].set(wa).at[:, off2:off2 + hidden].set(wb)

    def pack_vec(va, vb):
        return (jnp.zeros((h2,), jnp.float32)
                .at[:hidden].set(va).at[off2:off2 + hidden].set(vb))

    sd, ad = state_dim, action_dim
    w1_s = pack_cols(w1_1[:sd], w1_2[:sd])
    w1_a = pack_cols(w1_1[sd:sd + ad], w1_2[sd:sd + ad])
    w1_g = pack_cols(w1_1[sd + ad:], w1_2[sd + ad:])

    if split:
        def pad_sq(w):
            return jnp.zeros((hp, hp), jnp.float32).at[:hidden, :hidden].set(w)
        # (4, hp, hp): [w2_critic1, w2_critic2, w3_critic1, w3_critic2]
        w23 = jnp.stack([pad_sq(w2_1), pad_sq(w2_2), pad_sq(w3_1), pad_sq(w3_2)])
    else:
        def blockdiag(wa, wb):
            z = jnp.zeros((h2, h2), jnp.float32)
            return (z.at[:hidden, :hidden].set(wa)
                    .at[off2:off2 + hidden, off2:off2 + hidden].set(wb))
        # (2, h2, h2): [W2 block-diag, W3 block-diag]
        w23 = jnp.stack([blockdiag(w2_1, w2_2), blockdiag(w3_1, w3_2)])

    w4 = (jnp.zeros((h2, OUT_PAD), jnp.float32)
          .at[:hidden, 0].set(w4_1[:, 0])
          .at[off2:off2 + hidden, 1].set(w4_2[:, 0]))
    b4 = (jnp.zeros((1, OUT_PAD), jnp.float32)
          .at[0, 0].set(b4_1[0]).at[0, 1].set(b4_2[0]))

    return {
        "w1_s": w1_s.astype(jnp.bfloat16),   # (sd, h2)
        "w1_a": w1_a.astype(jnp.bfloat16),   # (ad, h2)
        "w1_g": w1_g.astype(jnp.bfloat16),   # (gd, h2)
        "w23": w23.astype(jnp.bfloat16),     # (4,hp,hp) split / (2,h2,h2) fused
        "w4": w4.astype(jnp.bfloat16),       # (h2, OUT_PAD)
        "b123": jnp.stack([pack_vec(b1_1, b1_2), pack_vec(b2_1, b2_2),
                           pack_vec(b3_1, b3_2)]),   # (3, h2) f32
        "b4": b4,                                    # (1, OUT_PAD) f32
    }


@functools.partial(jax.jit, static_argnames=("block_b",))
def hindsight_critic_forward(state, action, goal, packed, block_b=512):
    """Fused forward of both critics. Returns (q1, q2), each (B, 1) float32."""
    B, sd = state.shape
    ad = action.shape[1]
    gd = goal.shape[1]
    assert packed["w1_s"].shape[0] == sd
    assert packed["w1_a"].shape[0] == ad
    assert packed["w1_g"].shape[0] == gd
    # Split (per-critic) layout iff w23 carries 4 per-critic blocks.
    hp = packed["w23"].shape[1] if packed["w23"].shape[0] == 4 else None

    ew_dtype = _elementwise_dtype()

    # No wrapper-side padding: Pallas handles the partial last batch block
    # (rows are independent; the exp clamp keeps garbage rows harmless and
    # their output writes are masked). Tiny pad only for B < 8.
    if B < 8:
        pad = ((0, 8 - B), (0, 0))
        state = jnp.pad(state, pad)
        action = jnp.pad(action, pad)
        goal = jnp.pad(goal, pad)
        b_eff = 8
    else:
        b_eff = B

    # Batch tile: big enough to amortize per-step overhead, small enough for
    # v7x VMEM, and capped so the grid has >= 2 steps (v7x dual-TC sharding).
    blk = max(8, min(_round_up(block_b, 8), _round_up(b_eff, 8)))
    if b_eff > 8:
        blk = max(8, min(blk, _round_up(pl.cdiv(b_eff, 2), 8)))
    grid = (pl.cdiv(b_eff, blk),)

    def x_spec(d):
        return pl.BlockSpec((blk, d), lambda i: (i, 0))

    def w_spec(shape):
        nd = len(shape)
        # Grid-invariant parameters: single-buffer (constant index_map, so
        # double-buffering only wastes VMEM).
        return pl.BlockSpec(shape, lambda i: (0,) * nd,
                            pipeline_mode=pl.Buffered(1))

    out = pl.pallas_call(
        functools.partial(_critic_kernel, hp=hp, ew_dtype=ew_dtype),
        out_shape=jax.ShapeDtypeStruct((b_eff, OUT_PAD), jnp.bfloat16),
        grid_spec=pltpu.PrefetchScalarGridSpec(
            num_scalar_prefetch=0,
            grid=grid,
            in_specs=[
                x_spec(sd), x_spec(ad), x_spec(gd),
                w_spec(packed["w1_s"].shape),
                w_spec(packed["w1_a"].shape),
                w_spec(packed["w1_g"].shape),
                w_spec(packed["w23"].shape),
                w_spec(packed["w4"].shape),
                w_spec(packed["b123"].shape),
                w_spec(packed["b4"].shape),
            ],
            out_specs=pl.BlockSpec((blk, OUT_PAD), lambda i: (i, 0)),
        ),
        compiler_params=pltpu.CompilerParams(
            dimension_semantics=("parallel",),
            vmem_limit_bytes=48 * 1024 * 1024,
        ),
    )(state, action, goal,
      packed["w1_s"], packed["w1_a"], packed["w1_g"],
      packed["w23"], packed["w4"], packed["b123"], packed["b4"])

    q1 = out[:B, 0:1].astype(jnp.float32)
    q2 = out[:B, 1:2].astype(jnp.float32)
    return q1, q2


# ----------------------------- reference & init -----------------------------

def _mish_ref(x):
    sp = jnp.maximum(x, 0.0) + jnp.log1p(jnp.exp(-jnp.abs(x)))
    return x * jnp.tanh(sp)


def reference_forward(state, action, goal, params):
    x = jnp.concatenate([state, action, goal], axis=-1).astype(jnp.float32)

    def mlp(net):
        w1, b1, w2, b2, w3, b3, w4, b4 = net
        h = _mish_ref(x @ w1 + b1)
        h = _mish_ref(h @ w2 + b2)
        h = _mish_ref(h @ w3 + b3)
        return h @ w4 + b4

    return mlp(params["qf1"]), mlp(params["qf2"])


def init_mlp_params(key, dims):
    """PyTorch nn.Linear-style init: U(-1/sqrt(fan_in), 1/sqrt(fan_in)).
    dims = [d_in, h, h, h, 1]; weights stored (in, out)."""
    params = []
    for d_i, d_o in zip(dims[:-1], dims[1:]):
        key, kw, kb = jax.random.split(key, 3)
        bound = 1.0 / float(d_i) ** 0.5
        w = jax.random.uniform(kw, (d_i, d_o), jnp.float32, -bound, bound)
        b = jax.random.uniform(kb, (d_o,), jnp.float32, -bound, bound)
        params += [w, b]
    return key, params


if __name__ == "__main__":
    def run_case(key, batch, state_dim, action_dim, goal_dim, hidden_dim):
        d_in = state_dim + action_dim + goal_dim
        key, k_s, k_a, k_g = jax.random.split(key, 4)
        state = jax.random.normal(k_s, (batch, state_dim), jnp.float32)
        action = jax.random.normal(k_a, (batch, action_dim), jnp.float32)
        goal = jax.random.normal(k_g, (batch, goal_dim), jnp.float32)

        dims = [d_in, hidden_dim, hidden_dim, hidden_dim, 1]
        key, qf1_params = init_mlp_params(key, dims)
        key, qf2_params = init_mlp_params(key, dims)

        packed = pack_params(qf1_params, qf2_params,
                             state_dim, action_dim, goal_dim)
        q1, q2 = hindsight_critic_forward(state, action, goal, packed)
        jax.block_until_ready((q1, q2))

        # Sanity check vs. the pure-f32 JAX reference (tolerance covers bf16
        # MXU operands, bf16 elementwise on v6e/v7x and the approx reciprocal).
        r1, r2 = reference_forward(state, action, goal,
                                   {"qf1": qf1_params, "qf2": qf2_params})
        assert q1.shape == (batch, 1) and q2.shape == (batch, 1)
        assert jnp.allclose(q1, r1, atol=5e-2, rtol=5e-2), \
            float(jnp.max(jnp.abs(q1 - r1)))
        assert jnp.allclose(q2, r2, atol=5e-2, rtol=5e-2), \
            float(jnp.max(jnp.abs(q2 - r2)))
        return key

    key = jax.random.PRNGKey(0)
    # Batch not a multiple of 8 exercises the partial-last-block path.
    # hidden=32 -> fused block-diagonal path (2*hidden <= 128);
    # hidden=256 (module default) -> per-critic split path.
    key = run_case(key, batch=12, state_dim=16, action_dim=8, goal_dim=8,
                   hidden_dim=32)
    key = run_case(key, batch=12, state_dim=16, action_dim=8, goal_dim=8,
                   hidden_dim=256)

    # TODO(synk): loss()/loss_critic()/actor/target nets, soft target update
    # and the dataset normalizer are host-side training plumbing, not part of
    # forward(); forward_target/q1/q_min can reuse this kernel with their own
    # packed parameter sets.

    print("KERNEL_OK")
</pallas_src>

<mosaic_0001>
module attributes {stable_mosaic.version = 11 : i64} {
  func.func @_critic_kernel(%arg0: i32, %arg1: memref<8x16xf32, #tpu.memory_space<vmem>>, %arg2: memref<8x8xf32, #tpu.memory_space<vmem>>, %arg3: memref<8x8xf32, #tpu.memory_space<vmem>>, %arg4: memref<16x128xbf16, #tpu.memory_space<vmem>>, %arg5: memref<8x128xbf16, #tpu.memory_space<vmem>>, %arg6: memref<8x128xbf16, #tpu.memory_space<vmem>>, %arg7: memref<2x128x128xbf16, #tpu.memory_space<vmem>>, %arg8: memref<128x128xbf16, #tpu.memory_space<vmem>>, %arg9: memref<3x128xf32, #tpu.memory_space<vmem>>, %arg10: memref<1x128xf32, #tpu.memory_space<vmem>>, %arg11: memref<8x128xbf16, #tpu.memory_space<vmem>>) attributes {dimension_semantics = [#tpu.dimension_semantics<parallel>], iteration_bounds = array<i64: 2>, scalar_prefetch = 0 : i64, scratch_operands = 0 : i64, tpu.core_type = #tpu.core_type<tc>, window_params = [{transform_indices = @transform_0, window_bounds = array<i64: 8, 16>}, {transform_indices = @transform_1, window_bounds = array<i64: 8, 8>}, {transform_indices = @transform_2, window_bounds = array<i64: 8, 8>}, {pipeline_mode = #tpu.pipeline_mode<synchronous>, transform_indices = @transform_3, window_bounds = array<i64: 16, 128>}, {pipeline_mode = #tpu.pipeline_mode<synchronous>, transform_indices = @transform_4, window_bounds = array<i64: 8, 128>}, {pipeline_mode = #tpu.pipeline_mode<synchronous>, transform_indices = @transform_5, window_bounds = array<i64: 8, 128>}, {pipeline_mode = #tpu.pipeline_mode<synchronous>, transform_indices = @transform_6, window_bounds = array<i64: 2, 128, 128>}, {pipeline_mode = #tpu.pipeline_mode<synchronous>, transform_indices = @transform_7, window_bounds = array<i64: 128, 128>}, {pipeline_mode = #tpu.pipeline_mode<synchronous>, transform_indices = @transform_8, window_bounds = array<i64: 3, 128>}, {pipeline_mode = #tpu.pipeline_mode<synchronous>, transform_indices = @transform_9, window_bounds = array<i64: 1, 128>}, {transform_indices = @transform_10, window_bounds = array<i64: 8, 128>}]} {
    %c0 = arith.constant 0 : index
    %c0_0 = arith.constant 0 : index
    %0 = vector.load %arg1[%c0, %c0_0] : memref<8x16xf32, #tpu.memory_space<vmem>>, vector<8x16xf32>
    %1 = arith.truncf %0 : vector<8x16xf32> to vector<8x16xbf16>
    %c0_1 = arith.constant 0 : index
    %c0_2 = arith.constant 0 : index
    %2 = vector.load %arg2[%c0_1, %c0_2] : memref<8x8xf32, #tpu.memory_space<vmem>>, vector<8x8xf32>
    %3 = arith.truncf %2 : vector<8x8xf32> to vector<8x8xbf16>
    %c0_3 = arith.constant 0 : index
    %c0_4 = arith.constant 0 : index
    %4 = vector.load %arg3[%c0_3, %c0_4] : memref<8x8xf32, #tpu.memory_space<vmem>>, vector<8x8xf32>
    %5 = arith.truncf %4 : vector<8x8xf32> to vector<8x8xbf16>
    %c0_5 = arith.constant 0 : index
    %c0_6 = arith.constant 0 : index
    %6 = vector.load %arg9[%c0_5, %c0_6] : memref<3x128xf32, #tpu.memory_space<vmem>>, vector<3x128xf32>
    %c0_7 = arith.constant 0 : index
    %c0_8 = arith.constant 0 : index
    %7 = vector.load %arg4[%c0_7, %c0_8] : memref<16x128xbf16, #tpu.memory_space<vmem>>, vector<16x128xbf16>
    %cst = arith.constant dense<0.000000e+00> : vector<8x128xf32>
    %8 = tpu.matmul %1, %7, %cst {dimension_numbers = #tpu.dot_dimension_numbers<[1], [0], [0], [1], [0, 0, 1, 1], [], []>} : vector<8x16xbf16>, vector<16x128xbf16>, vector<8x128xf32> -> vector<8x128xf32>
    %c0_9 = arith.constant 0 : index
    %c0_10 = arith.constant 0 : index
    %9 = vector.load %arg5[%c0_9, %c0_10] : memref<8x128xbf16, #tpu.memory_space<vmem>>, vector<8x128xbf16>
    %cst_11 = arith.constant dense<0.000000e+00> : vector<8x128xf32>
    %10 = tpu.matmul %3, %9, %cst_11 {dimension_numbers = #tpu.dot_dimension_numbers<[1], [0], [0], [1], [0, 0, 1, 1], [], []>} : vector<8x8xbf16>, vector<8x128xbf16>, vector<8x128xf32> -> vector<8x128xf32>
    %11 = arith.addf %8, %10 : vector<8x128xf32>
    %c0_12 = arith.constant 0 : index
    %c0_13 = arith.constant 0 : index
    %12 = vector.load %arg6[%c0_12, %c0_13] : memref<8x128xbf16, #tpu.memory_space<vmem>>, vector<8x128xbf16>
    %cst_14 = arith.constant dense<0.000000e+00> : vector<8x128xf32>
    %13 = tpu.matmul %5, %12, %cst_14 {dimension_numbers = #tpu.dot_dimension_numbers<[1], [0], [0], [1], [0, 0, 1, 1], [], []>} : vector<8x8xbf16>, vector<8x128xbf16>, vector<8x128xf32> -> vector<8x128xf32>
    %14 = arith.addf %11, %13 : vector<8x128xf32>
    %15 = vector.extract_strided_slice %6 {offsets = [0, 0], sizes = [1, 128], strides = [1, 1]} : vector<3x128xf32> to vector<1x128xf32>
    %16 = vector.broadcast %15 : vector<1x128xf32> to vector<8x128xf32>
    %17 = arith.addf %14, %16 : vector<8x128xf32>
    %cst_15 = arith.constant 1.200000e+01 : f32
    %18 = vector.broadcast %cst_15 : f32 to vector<8x128xf32>
    %19 = arith.minimumf %17, %18 : vector<8x128xf32>
    %20 = math.exp %19 : vector<8x128xf32>
    %cst_16 = arith.constant 1.000000e+00 : f32
    %21 = vector.broadcast %cst_16 : f32 to vector<8x128xf32>
    %22 = arith.addf %21, %20 : vector<8x128xf32>
    %23 = arith.mulf %22, %22 : vector<8x128xf32>
    %cst_17 = arith.constant 1.000000e+00 : f32
    %24 = vector.broadcast %cst_17 : f32 to vector<8x128xf32>
    %25 = arith.subf %23, %24 : vector<8x128xf32>
    %cst_18 = arith.constant 1.000000e+00 : f32
    %26 = vector.broadcast %cst_18 : f32 to vector<8x128xf32>
    %27 = arith.addf %23, %26 : vector<8x128xf32>
    %28 = tpu.reciprocal %27 {approx = true} : vector<8x128xf32> -> vector<8x128xf32>
    %29 = arith.mulf %25, %28 : vector<8x128xf32>
    %cst_19 = arith.constant 1.200000e+01 : f32
    %30 = vector.broadcast %cst_19 : f32 to vector<8x128xf32>
    %31 = arith.cmpf ogt, %17, %30 : vector<8x128xf32>
    %32 = arith.mulf %17, %29 : vector<8x128xf32>
    %33 = arith.select %31, %17, %32 : vector<8x128xi1>, vector<8x128xf32>
    %34 = arith.truncf %33 : vector<8x128xf32> to vector<8x128xbf16>
    %c0_20 = arith.constant 0 : index
    %c0_21 = arith.constant 0 : index
    %c0_22 = arith.constant 0 : index
    %35 = vector.load %arg7[%c0_20, %c0_21, %c0_22] : memref<2x128x128xbf16, #tpu.memory_space<vmem>>, vector<1x128x128xbf16>
    %36 = vector.shape_cast %35 : vector<1x128x128xbf16> to vector<128x128xbf16>
    %cst_23 = arith.constant dense<0.000000e+00> : vector<8x128xf32>
    %37 = tpu.matmul %34, %36, %cst_23 {dimension_numbers = #tpu.dot_dimension_numbers<[1], [0], [0], [1], [0, 0, 1, 1], [], []>} : vector<8x128xbf16>, vector<128x128xbf16>, vector<8x128xf32> -> vector<8x128xf32>
    %38 = vector.extract_strided_slice %6 {offsets = [1, 0], sizes = [1, 128], strides = [1, 1]} : vector<3x128xf32> to vector<1x128xf32>
    %39 = vector.broadcast %38 : vector<1x128xf32> to vector<8x128xf32>
    %40 = arith.addf %37, %39 : vector<8x128xf32>
    %cst_24 = arith.constant 1.200000e+01 : f32
    %41 = vector.broadcast %cst_24 : f32 to vector<8x128xf32>
    %42 = arith.minimumf %40, %41 : vector<8x128xf32>
    %43 = math.exp %42 : vector<8x128xf32>
    %cst_25 = arith.constant 1.000000e+00 : f32
    %44 = vector.broadcast %cst_25 : f32 to vector<8x128xf32>
    %45 = arith.addf %44, %43 : vector<8x128xf32>
    %46 = arith.mulf %45, %45 : vector<8x128xf32>
    %cst_26 = arith.constant 1.000000e+00 : f32
    %47 = vector.broadcast %cst_26 : f32 to vector<8x128xf32>
    %48 = arith.subf %46, %47 : vector<8x128xf32>
    %cst_27 = arith.constant 1.000000e+00 : f32
    %49 = vector.broadcast %cst_27 : f32 to vector<8x128xf32>
    %50 = arith.addf %46, %49 : vector<8x128xf32>
    %51 = tpu.reciprocal %50 {approx = true} : vector<8x128xf32> -> vector<8x128xf32>
    %52 = arith.mulf %48, %51 : vector<8x128xf32>
    %cst_28 = arith.constant 1.200000e+01 : f32
    %53 = vector.broadcast %cst_28 : f32 to vector<8x128xf32>
    %54 = arith.cmpf ogt, %40, %53 : vector<8x128xf32>
    %55 = arith.mulf %40, %52 : vector<8x128xf32>
    %56 = arith.select %54, %40, %55 : vector<8x128xi1>, vector<8x128xf32>
    %57 = arith.truncf %56 : vector<8x128xf32> to vector<8x128xbf16>
    %c1 = arith.constant 1 : index
    %c0_29 = arith.constant 0 : index
    %c0_30 = arith.constant 0 : index
    %58 = vector.load %arg7[%c1, %c0_29, %c0_30] : memref<2x128x128xbf16, #tpu.memory_space<vmem>>, vector<1x128x128xbf16>
    %59 = vector.shape_cast %58 : vector<1x128x128xbf16> to vector<128x128xbf16>
    %cst_31 = arith.constant dense<0.000000e+00> : vector<8x128xf32>
    %60 = tpu.matmul %57, %59, %cst_31 {dimension_numbers = #tpu.dot_dimension_numbers<[1], [0], [0], [1], [0, 0, 1, 1], [], []>} : vector<8x128xbf16>, vector<128x128xbf16>, vector<8x128xf32> -> vector<8x128xf32>
    %61 = vector.extract_strided_slice %6 {offsets = [2, 0], sizes = [1, 128], strides = [1, 1]} : vector<3x128xf32> to vector<1x128xf32>
    %62 = vector.broadcast %61 : vector<1x128xf32> to vector<8x128xf32>
    %63 = arith.addf %60, %62 : vector<8x128xf32>
    %cst_32 = arith.constant 1.200000e+01 : f32
    %64 = vector.broadcast %cst_32 : f32 to vector<8x128xf32>
    %65 = arith.minimumf %63, %64 : vector<8x128xf32>
    %66 = math.exp %65 : vector<8x128xf32>
    %cst_33 = arith.constant 1.000000e+00 : f32
    %67 = vector.broadcast %cst_33 : f32 to vector<8x128xf32>
    %68 = arith.addf %67, %66 : vector<8x128xf32>
    %69 = arith.mulf %68, %68 : vector<8x128xf32>
    %cst_34 = arith.constant 1.000000e+00 : f32
    %70 = vector.broadcast %cst_34 : f32 to vector<8x128xf32>
    %71 = arith.subf %69, %70 : vector<8x128xf32>
    %cst_35 = arith.constant 1.000000e+00 : f32
    %72 = vector.broadcast %cst_35 : f32 to vector<8x128xf32>
    %73 = arith.addf %69, %72 : vector<8x128xf32>
    %74 = tpu.reciprocal %73 {approx = true} : vector<8x128xf32> -> vector<8x128xf32>
    %75 = arith.mulf %71, %74 : vector<8x128xf32>
    %cst_36 = arith.constant 1.200000e+01 : f32
    %76 = vector.broadcast %cst_36 : f32 to vector<8x128xf32>
    %77 = arith.cmpf ogt, %63, %76 : vector<8x128xf32>
    %78 = arith.mulf %63, %75 : vector<8x128xf32>
    %79 = arith.select %77, %63, %78 : vector<8x128xi1>, vector<8x128xf32>
    %80 = arith.truncf %79 : vector<8x128xf32> to vector<8x128xbf16>
    %c0_37 = arith.constant 0 : index
    %c0_38 = arith.constant 0 : index
    %81 = vector.load %arg8[%c0_37, %c0_38] : memref<128x128xbf16, #tpu.memory_space<vmem>>, vector<128x128xbf16>
    %cst_39 = arith.constant dense<0.000000e+00> : vector<8x128xf32>
    %82 = tpu.matmul %80, %81, %cst_39 {dimension_numbers = #tpu.dot_dimension_numbers<[1], [0], [0], [1], [0, 0, 1, 1], [], []>} : vector<8x128xbf16>, vector<128x128xbf16>, vector<8x128xf32> -> vector<8x128xf32>
    %c0_40 = arith.constant 0 : index
    %c0_41 = arith.constant 0 : index
    %83 = vector.load %arg10[%c0_40, %c0_41] : memref<1x128xf32, #tpu.memory_space<vmem>>, vector<1x128xf32>
    %84 = vector.broadcast %83 : vector<1x128xf32> to vector<8x128xf32>
    %85 = arith.addf %82, %84 : vector<8x128xf32>
    %86 = arith.truncf %85 : vector<8x128xf32> to vector<8x128xbf16>
    %c0_42 = arith.constant 0 : index
    %c0_43 = arith.constant 0 : index
    %87 = vector.load %arg11[%c0_42, %c0_43] : memref<8x128xbf16, #tpu.memory_space<vmem>>, vector<8x128xbf16>
    tpu.vector_store %arg11[%c0_42, %c0_43], %86 {strides = array<i32>} : memref<8x128xbf16, #tpu.memory_space<vmem>>, vector<8x128xbf16>,
    return
  }
  func.func @transform_0(%arg0: i32) -> (i32, i32) {
    %c0_i32 = arith.constant 0 : i32
    %c0_i32_0 = arith.constant 0 : i32
    return %arg0, %c0_i32 : i32, i32
  }
  func.func @transform_1(%arg0: i32) -> (i32, i32) {
    %c0_i32 = arith.constant 0 : i32
    %c0_i32_0 = arith.constant 0 : i32
    return %arg0, %c0_i32 : i32, i32
  }
  func.func @transform_2(%arg0: i32) -> (i32, i32) {
    %c0_i32 = arith.constant 0 : i32
    %c0_i32_0 = arith.constant 0 : i32
    return %arg0, %c0_i32 : i32, i32
  }
  func.func @transform_3(%arg0: i32) -> (i32, i32) {
    %c0_i32 = arith.constant 0 : i32
    %c0_i32_0 = arith.constant 0 : i32
    %c0_i32_1 = arith.constant 0 : i32
    return %c0_i32, %c0_i32_0 : i32, i32
  }
  func.func @transform_4(%arg0: i32) -> (i32, i32) {
    %c0_i32 = arith.constant 0 : i32
    %c0_i32_0 = arith.constant 0 : i32
    %c0_i32_1 = arith.constant 0 : i32
    return %c0_i32, %c0_i32_0 : i32, i32
  }
  func.func @transform_5(%arg0: i32) -> (i32, i32) {
    %c0_i32 = arith.constant 0 : i32
    %c0_i32_0 = arith.constant 0 : i32
    %c0_i32_1 = arith.constant 0 : i32
    return %c0_i32, %c0_i32_0 : i32, i32
  }
  func.func @transform_6(%arg0: i32) -> (i32, i32, i32) {
    %c0_i32 = arith.constant 0 : i32
    %c0_i32_0 = arith.constant 0 : i32
    %c0_i32_1 = arith.constant 0 : i32
    %c0_i32_2 = arith.constant 0 : i32
    return %c0_i32, %c0_i32_0, %c0_i32_1 : i32, i32, i32
  }
  func.func @transform_7(%arg0: i32) -> (i32, i32) {
    %c0_i32 = arith.constant 0 : i32
    %c0_i32_0 = arith.constant 0 : i32
    %c0_i32_1 = arith.constant 0 : i32
    return %c0_i32, %c0_i32_0 : i32, i32
  }
  func.func @transform_8(%arg0: i32) -> (i32, i32) {
    %c0_i32 = arith.constant 0 : i32
    %c0_i32_0 = arith.constant 0 : i32
    %c0_i32_1 = arith.constant 0 : i32
    return %c0_i32, %c0_i32_0 : i32, i32
  }
  func.func @transform_9(%arg0: i32) -> (i32, i32) {
    %c0_i32 = arith.constant 0 : i32
    %c0_i32_0 = arith.constant 0 : i32
    %c0_i32_1 = arith.constant 0 : i32
    return %c0_i32, %c0_i32_0 : i32, i32
  }
  func.func @transform_10(%arg0: i32) -> (i32, i32) {
    %c0_i32 = arith.constant 0 : i32
    %c0_i32_0 = arith.constant 0 : i32
    return %arg0, %c0_i32 : i32, i32
  }
}

</mosaic_0001>

<llo_original>
// kernel: hindsight_critic_forward.1
$region0: #{hindsight_critic_forward.1}
  #allocation0 [shape = 'u32[]', space=smem, size = 0x4, offset = 0x4, fixed_abs, tag = 'smem constant byte address 0x4 - core index']
  #allocation1 [shape = 'u32[72,128]{1,0:T(1,128)}', space=vmem, size = 0x9000, scoped, tag = 'internal scratch']
  %s0 = inlined_call_operand.vmem [shape: f32[12,16], index: 0, kind: input, shape index: {}]
  %s1 = inlined_call_operand.vmem [shape: f32[12,8], index: 1, kind: input, shape index: {}]
  %s2 = inlined_call_operand.vmem [shape: f32[12,8], index: 2, kind: input, shape index: {}]
  %s3 = inlined_call_operand.vmem [shape: bf16[16,128], index: 3, kind: input, shape index: {}]
  %s4 = inlined_call_operand.vmem [shape: bf16[8,128], index: 4, kind: input, shape index: {}]
  %s5 = inlined_call_operand.vmem [shape: bf16[8,128], index: 5, kind: input, shape index: {}]
  %s6 = inlined_call_operand.hbm [shape: bf16[2,128,128], index: 6, kind: input, shape index: {}]
  %s7 = inlined_call_operand.hbm [shape: bf16[128,128], index: 7, kind: input, shape index: {}]
  %s8 = inlined_call_operand.vmem [shape: f32[3,128], index: 8, kind: input, shape index: {}]
  %s9 = inlined_call_operand.vmem [shape: f32[1,128], index: 9, kind: input, shape index: {}]
  %s10 = inlined_call_operand.vmem [shape: bf16[12,128], index: 10, kind: output, shape index: {}]
  %s11 = sld [smem:[#allocation0]]
  $region81: #{hindsight_critic_forward.1} parent=0
    _
  %s13 = ssub.s32 1, %s11
  %s14 = scalar_select 0, %s13, %s11
  $region1: #{hindsight_critic_forward.1} parent=0
    #allocation2 [shape = 'u8[65536]{0}', space=vmem, size = 0x10000, scoped, tag = 'input window, operand 6, single buffered']
    #allocation3 [shape = 's32[2]{0}', space=sflag, size = 0x8, scoped, tag = 'scoped memory for hindsight_critic_forward.1']
    #allocation4 [shape = 'u8[32768]{0}', space=vmem, size = 0x8000, scoped, tag = 'input window, operand 7, single buffered']
    #allocation5 [shape = 's32[1]{0}', space=sflag, size = 0x4, scoped, tag = 'scoped memory for hindsight_critic_forward.1']
    %15 = vsyncpa [#allocation3], 0
    %16 = vsyncpa [#allocation5], 0
    loop: start=0, step=1, limit=4
    $region2: #{hindsight_critic_forward.1} parent=1 // loop_pre_header
      _
    $region3: #{hindsight_critic_forward.1} parent=1 // loop_header
      %s18 = sphi 0, %s22
      %p19 = scmp.ge.s32.totalorder %s18, 4
      %s28 = sphi 0, %s30
      %s31 = sphi 0, %s28
      %s32 = sphi 0, %s31
      %s48 = sphi 0, %s32
      %s54 = sphi 0, %s56
      %s57 = sphi 0, %s54
      %s58 = sphi 0, %s57
      %s74 = sphi 0, %s58
      %s80 = sphi 0, %s82
      %s83 = sphi 0, %s80
      %s84 = sphi 0, %s83
      %s100 = sphi 0, %s84
      %s104 = sphi 0, %s104
      %s106 = sphi 0, %s104
      %s107 = sphi 0, %s106
      %s121 = sphi 0, %s107
      %s125 = sphi 0, %s125
      %s127 = sphi 0, %s125
      %s128 = sphi 0, %s127
      %s142 = sphi 0, %s128
      %s146 = sphi 0, %s146
      %s148 = sphi 0, %s146
      %s149 = sphi 0, %s148
      %s163 = sphi 0, %s149
      %s167 = sphi 0, %s167
      %s169 = sphi 0, %s167
      %s170 = sphi 0, %s169
      %s184 = sphi 0, %s170
      %s188 = sphi 0, %s188
      %s190 = sphi 0, %s188
      %s191 = sphi 0, %s190
      %s205 = sphi 0, %s191
      %s209 = sphi 0, %s209
      %s211 = sphi 0, %s209
      %s212 = sphi 0, %s211
      %s226 = sphi 0, %s212
      %s230 = sphi 0, %s230
      %s232 = sphi 0, %s230
      %s233 = sphi 0, %s232
      %s247 = sphi 0, %s233
      %s253 = sphi 0, %s255
      %s256 = sphi 0, %s253
      %s257 = sphi 0, %s256
      %s273 = sphi 0, %s257
    $region4: #{hindsight_critic_forward.1} parent=1 // loop_header_branch
      %21 = sbr.rel (%p19) target = $region8
    $region5: #{hindsight_critic_forward.1} parent=1 // loop_body
      %s23 = ssub.s32 %s18, 1
      %s24 = ssub.s32 %s18, 2
      %s25 = sadd.s32 %s18, 1
      %s26 = ssub.s32 %s18, %s25
      %p27 = scmp.eq.s32.totalorder %s26, 0
      %s29 = sadd.s32 %s28, 1
      %s30 = scalar_select %p27, %s28, %s29
      %p33 = pneg %p27
      %p34 = scmp.eq.s32.totalorder %s18, 1
      %p35 = por %p33, %p34
      %p36 = scmp.ne.s32.totalorder %s28, %s31
      %p37 = scmp.eq.s32.totalorder %s18, 0
      %p38 = por %p36, %p37
      %p39 = scmp.ne.s32.totalorder %s28, %s31
      %p40 = scmp.eq.s32.totalorder %s23, 1
      %p41 = por %p39, %p40
      %p42 = scmp.ne.s32.totalorder %s31, %s32
      %p43 = scmp.eq.s32.totalorder %s23, 0
      %p44 = por %p42, %p43
      %p45 = scmp.ne.s32.totalorder %s31, %s32
      %p46 = scmp.eq.s32.totalorder %s24, 1
      %p47 = por %p45, %p46
      %p49 = scmp.ne.s32.totalorder %s32, %s48
      %p50 = scmp.eq.s32.totalorder %s24, 0
      %p51 = por %p49, %p50
      %s52 = ssub.s32 %s18, %s25
      %p53 = scmp.eq.s32.totalorder %s52, 0
      %s55 = sadd.s32 %s54, 1
      %s56 = scalar_select %p53, %s54, %s55
      %p59 = pneg %p53
      %p60 = scmp.eq.s32.totalorder %s18, 1
      %p61 = por %p59, %p60
      %p62 = scmp.ne.s32.totalorder %s54, %s57
      %p63 = scmp.eq.s32.totalorder %s18, 0
      %p64 = por %p62, %p63
      %p65 = scmp.ne.s32.totalorder %s54, %s57
      %p66 = scmp.eq.s32.totalorder %s23, 1
      %p67 = por %p65, %p66
      %p68 = scmp.ne.s32.totalorder %s57, %s58
      %p69 = scmp.eq.s32.totalorder %s23, 0
      %p70 = por %p68, %p69
      %p71 = scmp.ne.s32.totalorder %s57, %s58
      %p72 = scmp.eq.s32.totalorder %s24, 1
      %p73 = por %p71, %p72
      %p75 = scmp.ne.s32.totalorder %s58, %s74
      %p76 = scmp.eq.s32.totalorder %s24, 0
      %p77 = por %p75, %p76
      %s78 = ssub.s32 %s18, %s25
      %p79 = scmp.eq.s32.totalorder %s78, 0
      %s81 = sadd.s32 %s80, 1
      %s82 = scalar_select %p79, %s80, %s81
      %p85 = pneg %p79
      %p86 = scmp.eq.s32.totalorder %s18, 1
      %p87 = por %p85, %p86
      %p88 = scmp.ne.s32.totalorder %s80, %s83
      %p89 = scmp.eq.s32.totalorder %s18, 0
      %p90 = por %p88, %p89
      %p91 = scmp.ne.s32.totalorder %s80, %s83
      %p92 = scmp.eq.s32.totalorder %s23, 1
      %p93 = por %p91, %p92
      %p94 = scmp.ne.s32.totalorder %s83, %s84
      %p95 = scmp.eq.s32.totalorder %s23, 0
      %p96 = por %p94, %p95
      %p97 = scmp.ne.s32.totalorder %s83, %s84
      %p98 = scmp.eq.s32.totalorder %s24, 1
      %p99 = por %p97, %p98
      %p101 = scmp.ne.s32.totalorder %s84, %s100
      %p102 = scmp.eq.s32.totalorder %s24, 0
      %p103 = por %p101, %p102
      %s105 = sadd.s32 %s104, 1
      %p108 = scmp.eq.s32.totalorder %s18, 1
      %p109 = scmp.ne.s32.totalorder %s104, %s106
      %p110 = scmp.eq.s32.totalorder %s18, 0
      %p111 = por %p109, %p110
      %p112 = scmp.ne.s32.totalorder %s104, %s106
      %p113 = scmp.eq.s32.totalorder %s23, 1
      %p114 = por %p112, %p113
      %p115 = scmp.ne.s32.totalorder %s106, %s107
      %p116 = scmp.eq.s32.totalorder %s23, 0
      %p117 = por %p115, %p116
      %p118 = scmp.ne.s32.totalorder %s106, %s107
      %p119 = scmp.eq.s32.totalorder %s24, 1
      %p120 = por %p118, %p119
      %p122 = scmp.ne.s32.totalorder %s107, %s121
      %p123 = scmp.eq.s32.totalorder %s24, 0
      %p124 = por %p122, %p123
      %s126 = sadd.s32 %s125, 1
      %p129 = scmp.eq.s32.totalorder %s18, 1
      %p130 = scmp.ne.s32.totalorder %s125, %s127
      %p131 = scmp.eq.s32.totalorder %s18, 0
      %p132 = por %p130, %p131
      %p133 = scmp.ne.s32.totalorder %s125, %s127
      %p134 = scmp.eq.s32.totalorder %s23, 1
      %p135 = por %p133, %p134
      %p136 = scmp.ne.s32.totalorder %s127, %s128
      %p137 = scmp.eq.s32.totalorder %s23, 0
      %p138 = por %p136, %p137
      %p139 = scmp.ne.s32.totalorder %s127, %s128
      %p140 = scmp.eq.s32.totalorder %s24, 1
      %p141 = por %p139, %p140
      %p143 = scmp.ne.s32.totalorder %s128, %s142
      %p144 = scmp.eq.s32.totalorder %s24, 0
      %p145 = por %p143, %p144
      %s147 = sadd.s32 %s146, 1
      %p150 = scmp.eq.s32.totalorder %s18, 1
      %p151 = scmp.ne.s32.totalorder %s146, %s148
      %p152 = scmp.eq.s32.totalorder %s18, 0
      %p153 = por %p151, %p152
      %p154 = scmp.ne.s32.totalorder %s146, %s148
      %p155 = scmp.eq.s32.totalorder %s23, 1
      %p156 = por %p154, %p155
      %p157 = scmp.ne.s32.totalorder %s148, %s149
      %p158 = scmp.eq.s32.totalorder %s23, 0
      %p159 = por %p157, %p158
      %p160 = scmp.ne.s32.totalorder %s148, %s149
      %p161 = scmp.eq.s32.totalorder %s24, 1
      %p162 = por %p160, %p161
      %p164 = scmp.ne.s32.totalorder %s149, %s163
      %p165 = scmp.eq.s32.totalorder %s24, 0
      %p166 = por %p164, %p165
      %s168 = sadd.s32 %s167, 1
      %p171 = scmp.eq.s32.totalorder %s18, 1
      %p172 = scmp.ne.s32.totalorder %s167, %s169
      %p173 = scmp.eq.s32.totalorder %s18, 0
      %p174 = por %p172, %p173
      %p175 = scmp.ne.s32.totalorder %s167, %s169
      %p176 = scmp.eq.s32.totalorder %s23, 1
      %p177 = por %p175, %p176
      %p178 = scmp.ne.s32.totalorder %s169, %s170
      %p179 = scmp.eq.s32.totalorder %s23, 0
      %p180 = por %p178, %p179
      %p181 = scmp.ne.s32.totalorder %s169, %s170
      %p182 = scmp.eq.s32.totalorder %s24, 1
      %p183 = por %p181, %p182
      %p185 = scmp.ne.s32.totalorder %s170, %s184
      %p186 = scmp.eq.s32.totalorder %s24, 0
      %p187 = por %p185, %p186
      %s189 = sadd.s32 %s188, 1
      %p192 = scmp.eq.s32.totalorder %s18, 1
      %p193 = scmp.ne.s32.totalorder %s188, %s190
      %p194 = scmp.eq.s32.totalorder %s18, 0
      %p195 = por %p193, %p194
      %p196 = scmp.ne.s32.totalorder %s188, %s190
      %p197 = scmp.eq.s32.totalorder %s23, 1
      %p198 = por %p196, %p197
      %p199 = scmp.ne.s32.totalorder %s190, %s191
      %p200 = scmp.eq.s32.totalorder %s23, 0
      %p201 = por %p199, %p200
      %p202 = scmp.ne.s32.totalorder %s190, %s191
      %p203 = scmp.eq.s32.totalorder %s24, 1
      %p204 = por %p202, %p203
      %p206 = scmp.ne.s32.totalorder %s191, %s205
      %p207 = scmp.eq.s32.totalorder %s24, 0
      %p208 = por %p206, %p207
      %s210 = sadd.s32 %s209, 1
      %p213 = scmp.eq.s32.totalorder %s18, 1
      %p214 = scmp.ne.s32.totalorder %s209, %s211
      %p215 = scmp.eq.s32.totalorder %s18, 0
      %p216 = por %p214, %p215
      %p217 = scmp.ne.s32.totalorder %s209, %s211
      %p218 = scmp.eq.s32.totalorder %s23, 1
      %p219 = por %p217, %p218
      %p220 = scmp.ne.s32.totalorder %s211, %s212
      %p221 = scmp.eq.s32.totalorder %s23, 0
      %p222 = por %p220, %p221
      %p223 = scmp.ne.s32.totalorder %s211, %s212
      %p224 = scmp.eq.s32.totalorder %s24, 1
      %p225 = por %p223, %p224
      %p227 = scmp.ne.s32.totalorder %s212, %s226
      %p228 = scmp.eq.s32.totalorder %s24, 0
      %p229 = por %p227, %p228
      %s231 = sadd.s32 %s230, 1
      %p234 = scmp.eq.s32.totalorder %s18, 1
      %p235 = scmp.ne.s32.totalorder %s230, %s232
      %p236 = scmp.eq.s32.totalorder %s18, 0
      %p237 = por %p235, %p236
      %p238 = scmp.ne.s32.totalorder %s230, %s232
      %p239 = scmp.eq.s32.totalorder %s23, 1
      %p240 = por %p238, %p239
      %p241 = scmp.ne.s32.totalorder %s232, %s233
      %p242 = scmp.eq.s32.totalorder %s23, 0
      %p243 = por %p241, %p242
      %p244 = scmp.ne.s32.totalorder %s232, %s233
      %p245 = scmp.eq.s32.totalorder %s24, 1
      %p246 = por %p244, %p245
      %p248 = scmp.ne.s32.totalorder %s233, %s247
      %p249 = scmp.eq.s32.totalorder %s24, 0
      %p250 = por %p248, %p249
      %s251 = ssub.s32 %s18, %s25
      %p252 = scmp.eq.s32.totalorder %s251, 0
      %s254 = sadd.s32 %s253, 1
      %s255 = scalar_select %p252, %s253, %s254
      %p258 = pneg %p252
      %p259 = scmp.eq.s32.totalorder %s18, 1
      %p260 = por %p258, %p259
      %p261 = scmp.ne.s32.totalorder %s253, %s256
      %p262 = scmp.eq.s32.totalorder %s18, 0
      %p263 = por %p261, %p262
      %p264 = scmp.ne.s32.totalorder %s253, %s256
      %p265 = scmp.eq.s32.totalorder %s23, 1
      %p266 = por %p264, %p265
      %p267 = scmp.ne.s32.totalorder %s256, %s257
      %p268 = scmp.eq.s32.totalorder %s23, 0
      %p269 = por %p267, %p268
      %p270 = scmp.ne.s32.totalorder %s256, %s257
      %p271 = scmp.eq.s32.totalorder %s24, 1
      %p272 = por %p270, %p271
      %p274 = scmp.ne.s32.totalorder %s257, %s273
      %p275 = scmp.eq.s32.totalorder %s24, 0
      %p276 = por %p274, %p275
      %p277 = scmp.le.s32.totalorder 1, %s18
      %p278 = scmp.lt.s32.totalorder %s18, 3
      %p279 = pnand %p277, %p278
      %p280 = pneg %p279
      // Predicated region
      $region9: #{hindsight_critic_forward.1} parent=5 // pred_check
        _
      $region10: #{hindsight_critic_forward.1} parent=5 // pred_check_branch
        %282 = sbr.rel (%p279) target = $region12
      $region11: #{hindsight_critic_forward.1} parent=5 // pred_region
        %s283 = ssub.s32 %s18, 1
        // Predicated region
        $region13: #{hindsight_critic_forward.1} parent=11 // pred_check
          %p284 = pneg %p117
        $region14: #{hindsight_critic_forward.1} parent=11 // pred_check_branch
          %286 = sbr.rel (%p284) target = $region16
        $region15: #{hindsight_critic_forward.1} parent=11 // pred_region
          _
        $region16: #{hindsight_critic_forward.1} parent=11 // pred_fallthru
          _
        // Predicated region
        $region17: #{hindsight_critic_forward.1} parent=11 // pred_check
          %p287 = pneg %p138
        $region18: #{hindsight_critic_forward.1} parent=11 // pred_check_branch
          %289 = sbr.rel (%p287) target = $region20
        $region19: #{hindsight_critic_forward.1} parent=11 // pred_region
          _
        $region20: #{hindsight_critic_forward.1} parent=11 // pred_fallthru
          _
        // Predicated region
        $region21: #{hindsight_critic_forward.1} parent=11 // pred_check
          %p290 = pneg %p159
        $region22: #{hindsight_critic_forward.1} parent=11 // pred_check_branch
          %292 = sbr.rel (%p290) target = $region24
        $region23: #{hindsight_critic_forward.1} parent=11 // pred_region
          _
        $region24: #{hindsight_critic_forward.1} parent=11 // pred_fallthru
          _
        // Predicated region
        $region25: #{hindsight_critic_forward.1} parent=11 // pred_check
          %p293 = pneg %p180
        $region26: #{hindsight_critic_forward.1} parent=11 // pred_check_branch
          %295 = sbr.rel (%p293) target = $region28
        $region27: #{hindsight_critic_forward.1} parent=11 // pred_region
          %297 = vsyncadd [#allocation3], 0
          %s298 = sshll.u32 %s6, 4
          %s299 = int_to_ptr.hbm [resolvable:$true] %s298
          %s300 = sshll.u32 [#allocation2], 4
          %s301 = int_to_ptr.vmem [resolvable:$true] %s300
          %306 = dma.hbm_to_vmem [thread:$0]  %s299, 2048, %s301, [#allocation3], 64, 64, 4
        $region28: #{hindsight_critic_forward.1} parent=11 // pred_fallthru
          _
        // Predicated region
        $region29: #{hindsight_critic_forward.1} parent=11 // pred_check
          %p307 = pneg %p201
        $region30: #{hindsight_critic_forward.1} parent=11 // pred_check_branch
          %309 = sbr.rel (%p307) target = $region32
        $region31: #{hindsight_critic_forward.1} parent=11 // pred_region
          %311 = vsyncadd [#allocation5], 0
          %s312 = sshll.u32 %s7, 4
          %s313 = int_to_ptr.hbm [resolvable:$true] %s312
          %s314 = sshll.u32 [#allocation4], 4
          %s315 = int_to_ptr.vmem [resolvable:$true] %s314
          %320 = dma.hbm_to_vmem [thread:$0]  %s313, 1024, %s315, [#allocation5], 64, 64, 4
        $region32: #{hindsight_critic_forward.1} parent=11 // pred_fallthru
          _
        // Predicated region
        $region33: #{hindsight_critic_forward.1} parent=11 // pred_check
          %p321 = pneg %p222
        $region34: #{hindsight_critic_forward.1} parent=11 // pred_check_branch
          %323 = sbr.rel (%p321) target = $region36
        $region35: #{hindsight_critic_forward.1} parent=11 // pred_region
          _
        $region36: #{hindsight_critic_forward.1} parent=11 // pred_fallthru
          _
        // Predicated region
        $region37: #{hindsight_critic_forward.1} parent=11 // pred_check
          %p324 = pneg %p243
        $region38: #{hindsight_critic_forward.1} parent=11 // pred_check_branch
          %326 = sbr.rel (%p324) target = $region40
        $region39: #{hindsight_critic_forward.1} parent=11 // pred_region
          _
        $region40: #{hindsight_critic_forward.1} parent=11 // pred_fallthru
          _
      $region12: #{hindsight_critic_forward.1} parent=5 // pred_fallthru
        _
      %p327 = scmp.lt.s32.totalorder %s18, 2
      // Predicated region
      $region41: #{hindsight_critic_forward.1} parent=5 // pred_check
        %p328 = pneg %p327
      $region42: #{hindsight_critic_forward.1} parent=5 // pred_check_branch
        %330 = sbr.rel (%p328) target = $region44
      $region43: #{hindsight_critic_forward.1} parent=5 // pred_region
        // Predicated region
        $region45: #{hindsight_critic_forward.1} parent=43 // pred_check
          %p331 = pneg %p38
        $region46: #{hindsight_critic_forward.1} parent=43 // pred_check_branch
          %333 = sbr.rel (%p331) target = $region48
        $region47: #{hindsight_critic_forward.1} parent=43 // pred_region
          %p334 = scmp.lt.s32.totalorder %s18, 1
          %s335 = scalar_select %p334, %s18, 1
          %s336 = smul.addr %s335, 8
          %s337 = scalar_lea.vmem %s0, %s336
        $region48: #{hindsight_critic_forward.1} parent=43 // pred_fallthru
          _
        // Predicated region
        $region49: #{hindsight_critic_forward.1} parent=43 // pred_check
          %p338 = pneg %p64
        $region50: #{hindsight_critic_forward.1} parent=43 // pred_check_branch
          %340 = sbr.rel (%p338) target = $region52
        $region51: #{hindsight_critic_forward.1} parent=43 // pred_region
          %p341 = scmp.lt.s32.totalorder %s18, 1
          %s342 = scalar_select %p341, %s18, 1
          %s343 = smul.addr %s342, 8
          %s344 = scalar_lea.vmem %s1, %s343
        $region52: #{hindsight_critic_forward.1} parent=43 // pred_fallthru
          _
        // Predicated region
        $region53: #{hindsight_critic_forward.1} parent=43 // pred_check
          %p345 = pneg %p90
        $region54: #{hindsight_critic_forward.1} parent=43 // pred_check_branch
          %347 = sbr.rel (%p345) target = $region56
        $region55: #{hindsight_critic_forward.1} parent=43 // pred_region
          %p348 = scmp.lt.s32.totalorder %s18, 1
          %s349 = scalar_select %p348, %s18, 1
          %s350 = smul.addr %s349, 8
          %s351 = scalar_lea.vmem %s2, %s350
        $region56: #{hindsight_critic_forward.1} parent=43 // pred_fallthru
          _
      $region44: #{hindsight_critic_forward.1} parent=5 // pred_fallthru
        _
      %p352 = scmp.le.s32.totalorder 1, %s18
      %p353 = scmp.lt.s32.totalorder %s18, 3
      %p354 = pnand %p352, %p353
      %p355 = pneg %p354
      // Predicated region
      $region57: #{hindsight_critic_forward.1} parent=5 // pred_check
        _
      $region58: #{hindsight_critic_forward.1} parent=5 // pred_check_branch
        %357 = sbr.rel (%p354) target = $region60
      $region59: #{hindsight_critic_forward.1} parent=5 // pred_region
        %s358 = ssub.s32 %s18, 1
        // Predicated region
        $region61: #{hindsight_critic_forward.1} parent=59 // pred_check
          %p359 = pneg %p180
        $region62: #{hindsight_critic_forward.1} parent=59 // pred_check_branch
          %361 = sbr.rel (%p359) target = $region64
        $region63: #{hindsight_critic_forward.1} parent=59 // pred_region
          %363 = dma.done [#allocation3], 2048
        $region64: #{hindsight_critic_forward.1} parent=59 // pred_fallthru
          _
        // Predicated region
        $region65: #{hindsight_critic_forward.1} parent=59 // pred_check
          %p364 = pneg %p201
        $region66: #{hindsight_critic_forward.1} parent=59 // pred_check_branch
          %366 = sbr.rel (%p364) target = $region68
        $region67: #{hindsight_critic_forward.1} parent=59 // pred_region
          %368 = dma.done [#allocation5], 1024
        $region68: #{hindsight_critic_forward.1} parent=59 // pred_fallthru
          _
        %p369 = scmp.lt.s32.totalorder %s23, 1
        %s370 = scalar_select %p369, %s23, 1
        %s371 = smul.addr %s370, 8
        %s372 = scalar_lea.vmem %s0, %s371
        %p373 = pneg %p44
        %p374 = pneg %p41
        %p375 = scmp.lt.s32.totalorder %s23, 1
        %s376 = scalar_select %p375, %s23, 1
        %s377 = smul.addr %s376, 8
        %s378 = scalar_lea.vmem %s1, %s377
        %p379 = pneg %p70
        %p380 = pneg %p67
        %p381 = scmp.lt.s32.totalorder %s23, 1
        %s382 = scalar_select %p381, %s23, 1
        %s383 = smul.addr %s382, 8
        %s384 = scalar_lea.vmem %s2, %s383
        %p385 = pneg %p96
        %p386 = pneg %p93
        %p387 = pneg %p117
        %p388 = pneg %p114
        %p389 = pneg %p138
        %p390 = pneg %p135
        %p391 = pneg %p159
        %p392 = pneg %p156
        %p393 = pneg %p180
        %p394 = pneg %p177
        %p395 = pneg %p201
        %p396 = pneg %p198
        %p397 = pneg %p222
        %p398 = pneg %p219
        %p399 = pneg %p243
        %p400 = pneg %p240
        %p401 = pneg %p269
        %p402 = pneg %p266
        %p403 = scmp.lt.s32.totalorder %s23, 1
        %s404 = scalar_select %p403, %s23, 1
        %s405 = smul.addr %s404, 4
        %s406 = scalar_lea.vmem %s10, %s405
        %p407 = scmp.lt.s32.totalorder %s23, 1
        %s408 = scalar_select %p407, %s23, 1
        %s409 = smul.addr %s408, 8
        %s410 = scalar_lea.vmem %s0, %s409
        %p411 = scmp.lt.s32.totalorder %s23, 1
        %s412 = scalar_select %p411, %s23, 1
        %s413 = smul.addr %s412, 8
        %s414 = scalar_lea.vmem %s1, %s413
        %p415 = scmp.lt.s32.totalorder %s23, 1
        %s416 = scalar_select %p415, %s23, 1
        %s417 = smul.addr %s416, 8
        %s418 = scalar_lea.vmem %s2, %s417
        %p419 = scmp.lt.s32.totalorder %s23, 1
        %s420 = scalar_select %p419, %s23, 1
        %s421 = smul.addr %s420, 4
        %s422 = scalar_lea.vmem %s10, %s421
        %v424 = vld [vmem:[%s410] sm:$0xff]
        %v425 = vpack.c.bf16 %v424, %v424
        %v426 = vld [vmem:[%s414] sm:$0xff]
        %v427 = vpack.c.bf16 %v426, %v426
        %v428 = vld [vmem:[%s418] sm:$0xff]
        %v429 = vpack.c.bf16 %v428, %v428
        %v430 = vld [vmem:[%s8] sm:$0x7]
        %v431 = vld [vmem:[%s3] sm:$0xf]
        %v432 = vld [vmem:[%s3 + $0x4] sm:$0xf]
        %v433 = vld [vmem:[%s4] sm:$0xf]
        %vm434 = vcmask 64512
        %v436 = vsel %vm434, %v427, 0
        %vm438 = vcmask 1043456
        %v440 = vsel %vm438, %v433, 0
        %442 = vmatpush.bf16.msra.mxu0 0
        %443 = vmatpush.bf16.msra.mxu0 0
        %444 = vmatpush.bf16.msra.mxu0 0
        %445 = vmatpush.bf16.msra.mxu0 0
        %446 = vmatpush.bf16.msra.mxu0 0
        %447 = vmatpush.bf16.msra.mxu0 0
        %448 = vmatpush.bf16.msra.mxu0 0
        %449 = vmatpush.bf16.msra.mxu0 %v440
        %450 = vmatmul.bf16.gmra.mxu0 %v436
        %v451 = vpop.f32.mrf.mxu0
        %v452 = vadd.f32 0.0, %v451
        %v453 = vpop.f32.mrf.mxu0
        %454 = vdwg.mxu0
        %v457 = vunpack.c.l.b16 %v431
        %v458 = vunpack.c.l.b16 %v432
        %v459 = vpack.c.b16 %v458, %v457
        %vm461 = vcmask 130048
        %v463 = vsel %vm461, %v425, 0
        %465 = vmatpush.bf16.msra.mxu0 0
        %466 = vmatpush.bf16.msra.mxu0 0
        %467 = vmatpush.bf16.msra.mxu0 0
        %468 = vmatpush.bf16.msra.mxu0 0
        %469 = vmatpush.bf16.msra.mxu0 0
        %470 = vmatpush.bf16.msra.mxu0 0
        %471 = vmatpush.bf16.msra.mxu0 0
        %472 = vmatpush.bf16.msra.mxu0 %v459
        %473 = vmatmul.bf16.gmra.mxu0 %v463
        %v474 = vpop.f32.mrf.mxu0
        %v475 = vadd.f32 %v452, %v474
        %v476 = vpop.f32.mrf.mxu0
        %477 = vdwg.mxu0
        %v478 = vld [vmem:[%s5] sm:$0xf]
        %v480 = vsel %vm434, %v429, 0
        %v483 = vsel %vm438, %v478, 0
        %485 = vmatpush.bf16.msra.mxu0 0
        %486 = vmatpush.bf16.msra.mxu0 0
        %487 = vmatpush.bf16.msra.mxu0 0
        %488 = vmatpush.bf16.msra.mxu0 0
        %489 = vmatpush.bf16.msra.mxu0 0
        %490 = vmatpush.bf16.msra.mxu0 0
        %491 = vmatpush.bf16.msra.mxu0 0
        %492 = vmatpush.bf16.msra.mxu0 %v483
        %493 = vmatmul.bf16.gmra.mxu0 %v480
        %v494 = vpop.f32.mrf.mxu0
        %v495 = vadd.f32 0.0, %v494
        %v496 = vpop.f32.mrf.mxu0
        %497 = vdwg.mxu0
        %v498 = vadd.f32 %v475, %v495
        %v499 = vperm.slane %v430, 0
        %v500 = vadd.f32 %v498, %v499
        %v501 = vmin.f32 %v500, 12.0
        %v502 = vmul.f32 %v501, 1.442695
        %v503 = vpow.pop %v502
        %v504 = vadd.f32 %v503, 1.0
        %v505 = vmul.f32 %v504, %v504
        %v506 = vsub.f32 %v505, 1.0
        %v507 = vadd.f32 %v505, 1.0
        %v508 = vrcp.pop %v507
        %v509 = vmul.f32 %v506, %v508
        %vm510 = vcmp.gt.f32.partialorder %v500, 12.0
        %v511 = vmul.f32 %v500, %v509
        %v512 = vsel %vm510, %v500, %v511
        %v513 = vpack.c.bf16 %v512, %v512
        %v514 = vld [vmem:[#allocation2] sm:$0xf]
        %v515 = vld [vmem:[#allocation2 + $0x4] sm:$0xf]
        %v516 = vld [vmem:[#allocation2 + $0x8] sm:$0xf]
        %v517 = vld [vmem:[#allocation2 + $0xc] sm:$0xf]
        %v518 = vld [vmem:[#allocation2 + $0x10] sm:$0xf]
        %v519 = vld [vmem:[#allocation2 + $0x14] sm:$0xf]
        %v520 = vld [vmem:[#allocation2 + $0x18] sm:$0xf]
        %v521 = vld [vmem:[#allocation2 + $0x1c] sm:$0xf]
        %v522 = vld [vmem:[#allocation2 + $0x20] sm:$0xf]
        %v523 = vld [vmem:[#allocation2 + $0x24] sm:$0xf]
        %v524 = vld [vmem:[#allocation2 + $0x28] sm:$0xf]
        %v525 = vld [vmem:[#allocation2 + $0x2c] sm:$0xf]
        %v526 = vld [vmem:[#allocation2 + $0x30] sm:$0xf]
        %v527 = vld [vmem:[#allocation2 + $0x34] sm:$0xf]
        %v528 = vld [vmem:[#allocation2 + $0x38] sm:$0xf]
        %v529 = vld [vmem:[#allocation2 + $0x3c] sm:$0xf]
        %v530 = vperm.slane %v430, 1
        %v547 = vunpack.c.l.b16 %v514
        %v548 = vunpack.c.l.b16 %v515
        %v549 = vunpack.c.l.b16 %v516
        %v550 = vunpack.c.l.b16 %v517
        %v551 = vunpack.c.l.b16 %v518
        %v552 = vunpack.c.l.b16 %v519
        %v553 = vunpack.c.l.b16 %v520
        %v554 = vunpack.c.l.b16 %v521
        %v555 = vunpack.c.l.b16 %v522
        %v556 = vunpack.c.l.b16 %v523
        %v557 = vunpack.c.l.b16 %v524
        %v558 = vunpack.c.l.b16 %v525
        %v559 = vunpack.c.l.b16 %v526
        %v560 = vunpack.c.l.b16 %v527
        %v561 = vunpack.c.l.b16 %v528
        %v562 = vunpack.c.l.b16 %v529
        %v563 = vpack.c.b16 %v548, %v547
        %v564 = vpack.c.b16 %v550, %v549
        %v565 = vpack.c.b16 %v552, %v551
        %v566 = vpack.c.b16 %v554, %v553
        %v567 = vpack.c.b16 %v556, %v555
        %v568 = vpack.c.b16 %v558, %v557
        %v569 = vpack.c.b16 %v560, %v559
        %v570 = vpack.c.b16 %v562, %v561
        %579 = vmatpush.bf16.msra.mxu0 %v570
        %580 = vmatpush.bf16.msra.mxu0 %v569
        %581 = vmatpush.bf16.msra.mxu0 %v568
        %582 = vmatpush.bf16.msra.mxu0 %v567
        %583 = vmatpush.bf16.msra.mxu0 %v566
        %584 = vmatpush.bf16.msra.mxu0 %v565
        %585 = vmatpush.bf16.msra.mxu0 %v564
        %586 = vmatpush.bf16.msra.mxu0 %v563
        %587 = vmatmul.bf16.gmra.mxu0 %v513
        %v588 = vpop.f32.mrf.mxu0
        %v589 = vadd.f32 %v530, %v588
        %v590 = vpop.f32.mrf.mxu0
        %591 = vdwg.mxu0
        %v592 = vmin.f32 %v589, 12.0
        %v593 = vmul.f32 %v592, 1.442695
        %v594 = vpow.pop %v593
        %v595 = vadd.f32 %v594, 1.0
        %v596 = vmul.f32 %v595, %v595
        %v597 = vsub.f32 %v596, 1.0
        %v598 = vadd.f32 %v596, 1.0
        %v599 = vrcp.pop %v598
        %v600 = vmul.f32 %v597, %v599
        %vm601 = vcmp.gt.f32.partialorder %v589, 12.0
        %v602 = vmul.f32 %v589, %v600
        %v603 = vsel %vm601, %v589, %v602
        %v604 = vpack.c.bf16 %v603, %v603
        %s605 = scalar_lea.vmem [#allocation2], 64
        %v606 = vld [vmem:[%s605] sm:$0xf]
        %v607 = vld [vmem:[%s605 + $0x4] sm:$0xf]
        %v608 = vld [vmem:[%s605 + $0x8] sm:$0xf]
        %v609 = vld [vmem:[%s605 + $0xc] sm:$0xf]
        %v610 = vld [vmem:[%s605 + $0x10] sm:$0xf]
        %v611 = vld [vmem:[%s605 + $0x14] sm:$0xf]
        %v612 = vld [vmem:[%s605 + $0x18] sm:$0xf]
        %v613 = vld [vmem:[%s605 + $0x1c] sm:$0xf]
        %v614 = vld [vmem:[%s605 + $0x20] sm:$0xf]
        %v615 = vld [vmem:[%s605 + $0x24] sm:$0xf]
        %v616 = vld [vmem:[%s605 + $0x28] sm:$0xf]
        %v617 = vld [vmem:[%s605 + $0x2c] sm:$0xf]
        %v618 = vld [vmem:[%s605 + $0x30] sm:$0xf]
        %v619 = vld [vmem:[%s605 + $0x34] sm:$0xf]
        %v620 = vld [vmem:[%s605 + $0x38] sm:$0xf]
        %v621 = vld [vmem:[%s605 + $0x3c] sm:$0xf]
        %v622 = vperm.slane %v430, 2
        %v639 = vunpack.c.l.b16 %v606
        %v640 = vunpack.c.l.b16 %v607
        %v641 = vunpack.c.l.b16 %v608
        %v642 = vunpack.c.l.b16 %v609
        %v643 = vunpack.c.l.b16 %v610
        %v644 = vunpack.c.l.b16 %v611
        %v645 = vunpack.c.l.b16 %v612
        %v646 = vunpack.c.l.b16 %v613
        %v647 = vunpack.c.l.b16 %v614
        %v648 = vunpack.c.l.b16 %v615
        %v649 = vunpack.c.l.b16 %v616
        %v650 = vunpack.c.l.b16 %v617
        %v651 = vunpack.c.l.b16 %v618
        %v652 = vunpack.c.l.b16 %v619
        %v653 = vunpack.c.l.b16 %v620
        %v654 = vunpack.c.l.b16 %v621
        %v655 = vpack.c.b16 %v640, %v639
        %v656 = vpack.c.b16 %v642, %v641
        %v657 = vpack.c.b16 %v644, %v643
        %v658 = vpack.c.b16 %v646, %v645
        %v659 = vpack.c.b16 %v648, %v647
        %v660 = vpack.c.b16 %v650, %v649
        %v661 = vpack.c.b16 %v652, %v651
        %v662 = vpack.c.b16 %v654, %v653
        %671 = vmatpush.bf16.msra.mxu0 %v662
        %672 = vmatpush.bf16.msra.mxu0 %v661
        %673 = vmatpush.bf16.msra.mxu0 %v660
        %674 = vmatpush.bf16.msra.mxu0 %v659
        %675 = vmatpush.bf16.msra.mxu0 %v658
        %676 = vmatpush.bf16.msra.mxu0 %v657
        %677 = vmatpush.bf16.msra.mxu0 %v656
        %678 = vmatpush.bf16.msra.mxu0 %v655
        %679 = vmatmul.bf16.gmra.mxu0 %v604
        %v680 = vpop.f32.mrf.mxu0
        %v681 = vadd.f32 %v622, %v680
        %v682 = vpop.f32.mrf.mxu0
        %683 = vdwg.mxu0
        %v684 = vmin.f32 %v681, 12.0
        %v685 = vmul.f32 %v684, 1.442695
        %v686 = vpow.pop %v685
        %v687 = vadd.f32 %v686, 1.0
        %v688 = vmul.f32 %v687, %v687
        %v689 = vsub.f32 %v688, 1.0
        %v690 = vadd.f32 %v688, 1.0
        %v691 = vrcp.pop %v690
        %v692 = vmul.f32 %v689, %v691
        %vm693 = vcmp.gt.f32.partialorder %v681, 12.0
        %v694 = vmul.f32 %v681, %v692
        %v695 = vsel %vm693, %v681, %v694
        %v696 = vpack.c.bf16 %v695, %v695
        %v697 = vld [vmem:[#allocation4] sm:$0xf]
        %v698 = vld [vmem:[#allocation4 + $0x4] sm:$0xf]
        %v699 = vld [vmem:[#allocation4 + $0x8] sm:$0xf]
        %v700 = vld [vmem:[#allocation4 + $0xc] sm:$0xf]
        %v701 = vld [vmem:[#allocation4 + $0x10] sm:$0xf]
        %v702 = vld [vmem:[#allocation4 + $0x14] sm:$0xf]
        %v703 = vld [vmem:[#allocation4 + $0x18] sm:$0xf]
        %v704 = vld [vmem:[#allocation4 + $0x1c] sm:$0xf]
        %v705 = vld [vmem:[#allocation4 + $0x20] sm:$0xf]
        %v706 = vld [vmem:[#allocation4 + $0x24] sm:$0xf]
        %v707 = vld [vmem:[#allocation4 + $0x28] sm:$0xf]
        %v708 = vld [vmem:[#allocation4 + $0x2c] sm:$0xf]
        %v709 = vld [vmem:[#allocation4 + $0x30] sm:$0xf]
        %v710 = vld [vmem:[#allocation4 + $0x34] sm:$0xf]
        %v711 = vld [vmem:[#allocation4 + $0x38] sm:$0xf]
        %v712 = vld [vmem:[#allocation4 + $0x3c] sm:$0xf]
        %v713 = vld [vmem:[%s9] sm:$0x1]
        %v715 = vperm.slane %v713, 0
        %v733 = vunpack.c.l.b16 %v697
        %v734 = vunpack.c.l.b16 %v698
        %v735 = vunpack.c.l.b16 %v699
        %v736 = vunpack.c.l.b16 %v700
        %v737 = vunpack.c.l.b16 %v701
        %v738 = vunpack.c.l.b16 %v702
        %v739 = vunpack.c.l.b16 %v703
        %v740 = vunpack.c.l.b16 %v704
        %v741 = vunpack.c.l.b16 %v705
        %v742 = vunpack.c.l.b16 %v706
        %v743 = vunpack.c.l.b16 %v707
        %v744 = vunpack.c.l.b16 %v708
        %v745 = vunpack.c.l.b16 %v709
        %v746 = vunpack.c.l.b16 %v710
        %v747 = vunpack.c.l.b16 %v711
        %v748 = vunpack.c.l.b16 %v712
        %v749 = vpack.c.b16 %v734, %v733
        %v750 = vpack.c.b16 %v736, %v735
        %v751 = vpack.c.b16 %v738, %v737
        %v752 = vpack.c.b16 %v740, %v739
        %v753 = vpack.c.b16 %v742, %v741
        %v754 = vpack.c.b16 %v744, %v743
        %v755 = vpack.c.b16 %v746, %v745
        %v756 = vpack.c.b16 %v748, %v747
        %765 = vmatpush.bf16.msra.mxu0 %v756
        %766 = vmatpush.bf16.msra.mxu0 %v755
        %767 = vmatpush.bf16.msra.mxu0 %v754
        %768 = vmatpush.bf16.msra.mxu0 %v753
        %769 = vmatpush.bf16.msra.mxu0 %v752
        %770 = vmatpush.bf16.msra.mxu0 %v751
        %771 = vmatpush.bf16.msra.mxu0 %v750
        %772 = vmatpush.bf16.msra.mxu0 %v749
        %773 = vmatmul.bf16.gmra.mxu0 %v696
        %v774 = vpop.f32.mrf.mxu0
        %v775 = vadd.f32 %v715, %v774
        %v776 = vpop.f32.mrf.mxu0
        %777 = vdwg.mxu0
        %v778 = vpack.c.bf16 %v775, %v775
        %779 = vst [vmem:[%s422] sm:$0xf] %v778
        %p780 = scmp.lt.s32.totalorder %s23, 1
        %s781 = scalar_select %p780, %s23, 1
        %s782 = smul.addr %s781, 4
        %s783 = scalar_lea.vmem %s10, %s782
        // Predicated region
        $region69: #{hindsight_critic_forward.1} parent=59 // pred_check
          %p784 = pneg %p266
        $region70: #{hindsight_critic_forward.1} parent=59 // pred_check_branch
          %786 = sbr.rel (%p784) target = $region72
        $region71: #{hindsight_critic_forward.1} parent=59 // pred_region
          _
        $region72: #{hindsight_critic_forward.1} parent=59 // pred_fallthru
          _
      $region60: #{hindsight_critic_forward.1} parent=5 // pred_fallthru
        _
      %p787 = scmp.le.s32.totalorder 2, %s18
      // Predicated region
      $region73: #{hindsight_critic_forward.1} parent=5 // pred_check
        %p788 = pneg %p787
      $region74: #{hindsight_critic_forward.1} parent=5 // pred_check_branch
        %790 = sbr.rel (%p788) target = $region76
      $region75: #{hindsight_critic_forward.1} parent=5 // pred_region
        %s791 = ssub.s32 %s18, 2
        // Predicated region
        $region77: #{hindsight_critic_forward.1} parent=75 // pred_check
          %p792 = pneg %p272
        $region78: #{hindsight_critic_forward.1} parent=75 // pred_check_branch
          %794 = sbr.rel (%p792) target = $region80
        $region79: #{hindsight_critic_forward.1} parent=75 // pred_region
          %p795 = scmp.lt.s32.totalorder %s24, 1
          %s796 = scalar_select %p795, %s24, 1
          %s797 = smul.addr %s796, 4
          %s798 = scalar_lea.vmem %s10, %s797
        $region80: #{hindsight_critic_forward.1} parent=75 // pred_fallthru
          _
      $region76: #{hindsight_critic_forward.1} parent=5 // pred_fallthru
        _
    $region6: #{hindsight_critic_forward.1} parent=1 // loop_footer
      %s22 = sadd.s32 1, %s18
    $region7: #{hindsight_critic_forward.1} parent=1 // loop_footer_branch
      %17 = sbr.rel target = $region3
    $region8: #{hindsight_critic_forward.1} parent=1 // loop_exit
      _
    %799 = vsyncpa [#allocation3], 1
    %s800 = scalar_lea.sflag [#allocation3], 1
    %801 = vsyncpa %s800, 1
    %802 = vsyncpa [#allocation5], 1

</llo_original>
